<compile_context>
chip_gen: v5e
topology: v5e:2x2
jax: 0.10.0
libtpu: 0.0.40
codegen_flags: <defaults>
</compile_context>

<pallas_src>
import math
from functools import lru_cache, partial

import jax
import jax.numpy as jnp
import numpy as np
from jax import lax
from jax.experimental import pallas as pl
from jax.experimental.pallas import tpu as pltpu


# ---------------------------------------------------------------------------
# Interpolation operators (PyTorch-exact semantics), cached on the host
# ---------------------------------------------------------------------------
def _nearest_matrix(in_size, out_size):
    # PyTorch 'nearest': src = floor(dst * in/out)
    idx = np.floor(np.arange(out_size) * (in_size / out_size)).astype(np.int64)
    idx = np.clip(idx, 0, in_size - 1)
    a = np.zeros((out_size, in_size), np.float32)
    a[np.arange(out_size), idx] = 1.0
    return a


def _bilinear_matrix(in_size, out_size):
    # PyTorch 'bilinear', align_corners=False (half-pixel centers, clamped).
    scale = in_size / out_size
    src = (np.arange(out_size) + 0.5) * scale - 0.5
    src = np.maximum(src, 0.0)
    i0 = np.clip(np.floor(src).astype(np.int64), 0, in_size - 1)
    i1 = np.minimum(i0 + 1, in_size - 1)
    frac = (src - i0).astype(np.float32)
    a = np.zeros((out_size, in_size), np.float32)
    a[np.arange(out_size), i0] += (1.0 - frac)
    a[np.arange(out_size), i1] += frac
    return a


@lru_cache(maxsize=None)
def _np_interp_matrix(in_size, out_size, mode):
    if mode == 'bilinear':
        return _bilinear_matrix(in_size, out_size)
    return _nearest_matrix(in_size, out_size)


@lru_cache(maxsize=None)
def _np_scatter_matrices(w):
    # E scatters column c -> 2c, O scatters column c -> 2c+1 (0/1 matrices).
    e = np.zeros((w, 2 * w), np.float32)
    o = np.zeros((w, 2 * w), np.float32)
    e[np.arange(w), 2 * np.arange(w)] = 1.0
    o[np.arange(w), 2 * np.arange(w) + 1] = 1.0
    return e, o


@lru_cache(maxsize=None)
def _np_ah_split(h, ho, mode, g):
    # Row-group split of the H-axis operator: part p, row r == output row g*r + p.
    a = _np_interp_matrix(h, ho, mode)                     # (Ho, H)
    return np.ascontiguousarray(a.reshape(ho // g, g, h).transpose(1, 0, 2))


# ---------------------------------------------------------------------------
# Generation-aware VMEM budgeting and plane-block selection
# ---------------------------------------------------------------------------
def _vmem_budget():
    phys = 64 << 20                                        # conservative (v7x per-TC)
    try:
        info = pltpu.get_tpu_info()
        for name in ("vmem_capacity_bytes", "vmem_size_bytes", "vmem_bytes"):
            v = getattr(info, name, None)
            if v:
                phys = int(v)
                break
    except Exception:
        pass
    vmem_limit = int(min(phys * 3 // 4, 100 << 20))        # scoped VMEM limit
    block_budget = int(min(phys * 3 // 8, 40 << 20))       # per-block working set cap
    return vmem_limit, block_budget


def _tile_bytes(rows, cols, itemsize):
    r = ((rows + 7) // 8) * 8
    c = ((cols + 127) // 128) * 128
    return r * c * itemsize


def _per_plane_bytes(path, h, w, ho, wo, itemsize, g):
    """Rough per-plane VMEM footprint (double-buffered I/O + f32 temporaries)."""
    if path == 'learned':
        io = 2 * (_tile_bytes(h, w, itemsize) + _tile_bytes(h, 4 * w, itemsize))
        tmp = 14 * _tile_bytes(h, w, 4) + 6 * _tile_bytes(h, 2 * w, 4)
        return io + tmp
    if path == 'rep':
        io = 2 * (_tile_bytes(h, w, itemsize) + _tile_bytes(h, g * wo, itemsize))
        tmp = _tile_bytes(h, w, 4) + (2 + g) * _tile_bytes(h, wo, 4)
        return io + tmp
    io = 2 * (_tile_bytes(h, w, itemsize) + _tile_bytes(ho // g, g * wo, itemsize))
    tmp = (_tile_bytes(h, w, 4) + 2 * _tile_bytes(h, wo, 4)
           + g * _tile_bytes(ho // g, h, 4) + 3 * _tile_bytes(ho // g, g * wo, 4))
    return io + tmp


def _choose_block(planes, per_plane_bytes, budget):
    cap = max(1, budget // max(per_plane_bytes, 1))
    if planes >= 8:
        cap = min(cap, planes // 4)      # keep >=4 grid steps (megacore + pipelining)
    elif planes >= 2:
        cap = min(cap, planes // 2)      # keep >=2 grid steps
    cap = max(1, cap)
    best = 1
    for d in range(1, planes + 1):       # blocks are whole planes -> no (8,128) issues
        if planes % d == 0 and d <= cap:
            best = d
    return best


# ---------------------------------------------------------------------------
# Kernels
# ---------------------------------------------------------------------------
def _learned_kernel(x_ref, wt_ref, e_ref, om_ref, o_ref, *, zeropad, h, w):
    """Fused nearest-2x + pad + depthwise 3x3 as a polyphase 2x2 stencil on x."""
    f32 = jnp.float32
    x = x_ref[...].astype(f32)                             # (B, H, W)

    def zfill(piece):
        return jnp.zeros_like(piece) if zeropad else piece

    if h > 1:
        xu = jnp.concatenate([zfill(x[:, :1, :]), x[:, :-1, :]], axis=1)
        xd = jnp.concatenate([x[:, 1:, :], zfill(x[:, -1:, :])], axis=1)
    else:
        xu = zfill(x)
        xd = zfill(x)

    def shift_cols(a, left):
        if w == 1:
            return zfill(a)
        if left:
            return jnp.concatenate([zfill(a[:, :, :1]), a[:, :, :-1]], axis=2)
        return jnp.concatenate([a[:, :, 1:], zfill(a[:, :, -1:])], axis=2)

    xl = shift_cols(x, True)
    xr = shift_cols(x, False)
    xul = shift_cols(xu, True)
    xur = shift_cols(xu, False)
    xdl = shift_cols(xd, True)
    xdr = shift_cols(xd, False)

    wt = wt_ref[...].astype(f32)                           # (B, 1, 17)

    def wk(k):
        return wt[:, :, k:k + 1]                           # (B, 1, 1) per-plane scalar

    bias = wk(16)
    p_ee = wk(0) * xul + wk(1) * xu + wk(2) * xl + wk(3) * x + bias
    p_eo = wk(4) * xu + wk(5) * xur + wk(6) * x + wk(7) * xr + bias
    p_oe = wk(8) * xl + wk(9) * x + wk(10) * xdl + wk(11) * xd + bias
    p_oo = wk(12) * x + wk(13) * xr + wk(14) * xd + wk(15) * xdr + bias

    e_m = e_ref[...]                                       # (W, 2W)
    o_m = om_ref[...]                                      # (W, 2W)
    even = (jnp.dot(p_ee, e_m, preferred_element_type=f32)
            + jnp.dot(p_eo, o_m, preferred_element_type=f32))   # (B, H, 2W)
    odd = (jnp.dot(p_oe, e_m, preferred_element_type=f32)
           + jnp.dot(p_oo, o_m, preferred_element_type=f32))    # (B, H, 2W)

    # Row pair (2r, 2r+1) emitted as one lane-concatenated row -> free reshape outside.
    o_ref[...] = jnp.concatenate([even, odd], axis=-1).astype(o_ref.dtype)


def _nearest_rep_kernel(x_ref, awt_ref, o_ref, *, sh):
    """Nearest upsample with integer H scale: W column-scatter matmul + lane-concat."""
    t = jnp.dot(x_ref[...], awt_ref[...], preferred_element_type=jnp.float32)
    y = t if sh == 1 else jnp.concatenate([t] * sh, axis=-1)
    o_ref[...] = y.astype(o_ref.dtype)


def _generic_kernel(x_ref, awt_ref, ah_ref, o_ref, *, g, h, ho):
    """Bilinear / fractional-scale path: W matmul + batched H matmul, row-grouped out."""
    f32 = jnp.float32
    t = jnp.dot(x_ref[...], awt_ref[...], preferred_element_type=f32)   # (B, H, Wo)
    b = t.shape[0]
    parts = []
    for p in range(g):                                     # static, small
        ahp = ah_ref[p]                                    # (Ho//g, H)
        ahb = jnp.broadcast_to(ahp[None], (b, ho // g, h)).astype(f32)
        parts.append(lax.dot_general(ahb, t, (((2,), (1,)), ((0,), (0,))),
                                     preferred_element_type=f32))       # (B, Ho//g, Wo)
    y = parts[0] if g == 1 else jnp.concatenate(parts, axis=-1)
    o_ref[...] = y.astype(o_ref.dtype)


def _run_pallas(kernel, x3, extras, out_tail, c_blk, vmem_limit):
    """extras: list of (array, per_plane_blocked: bool)."""
    planes, h, w = x3.shape
    grid = (planes // c_blk,)
    in_specs = [pl.BlockSpec((c_blk, h, w), lambda i: (i, 0, 0))]
    args = [x3]
    for arr, per_plane in extras:
        if per_plane:
            blk = (c_blk,) + arr.shape[1:]
            in_specs.append(
                pl.BlockSpec(blk, lambda i, nd=arr.ndim: (i,) + (0,) * (nd - 1)))
        else:
            in_specs.append(
                pl.BlockSpec(arr.shape, lambda i, nd=arr.ndim: (0,) * nd))
        args.append(arr)
    out_shape = jax.ShapeDtypeStruct((planes,) + out_tail, x3.dtype)
    out_specs = pl.BlockSpec((c_blk,) + out_tail,
                             lambda i, nt=len(out_tail): (i,) + (0,) * nt)
    return pl.pallas_call(
        kernel,
        out_shape=out_shape,
        grid=grid,
        in_specs=in_specs,
        out_specs=out_specs,
        compiler_params=pltpu.CompilerParams(
            dimension_semantics=("parallel",),
            vmem_limit_bytes=vmem_limit),
    )(*args)


# ---------------------------------------------------------------------------
# Module-equivalent wrapper
# ---------------------------------------------------------------------------
class Upsampling:
    def __init__(self, mode, n_channels, scale_factor=2.0):
        self._n_channels = n_channels
        if isinstance(scale_factor, (tuple, list)):
            self._sf = (float(scale_factor[0]), float(scale_factor[1]))
        else:
            self._sf = (float(scale_factor), float(scale_factor))

        self._learned = 'learned-3x3' in mode
        if self._learned:
            assert self._sf == (2.0, 2.0)
            self._zeropad = (mode == 'learned-3x3-zeropad')
            w0 = np.array([[0.0625, 0.125, 0.0625],
                           [0.125, 0.25, 0.125],
                           [0.0625, 0.125, 0.0625]], np.float32)
            self.conv_weight = jnp.asarray(np.tile(w0[None], (n_channels, 1, 1)))
            self.conv_bias = jnp.zeros((n_channels,), jnp.float32)
            self._interp_mode = 'nearest'
        else:
            self._zeropad = False
            self.conv_weight = None
            self.conv_bias = None
            self._interp_mode = mode            # 'nearest' or 'bilinear'

    def _merged_weights(self):
        """Polyphase-merged 3x3 weights (+bias) per channel: (C, 17)."""
        wgt = self.conv_weight.astype(jnp.float32).reshape(self._n_channels, 3, 3)
        b = self.conv_bias.astype(jnp.float32)
        w00, w01, w02 = wgt[:, 0, 0], wgt[:, 0, 1], wgt[:, 0, 2]
        w10, w11, w12 = wgt[:, 1, 0], wgt[:, 1, 1], wgt[:, 1, 2]
        w20, w21, w22 = wgt[:, 2, 0], wgt[:, 2, 1], wgt[:, 2, 2]
        cols = [
            w00, w01 + w02, w10 + w20, w11 + w12 + w21 + w22,          # ee: ul, u, l, x
            w00 + w01, w02, w10 + w11 + w20 + w21, w12 + w22,          # eo: u, ur, x, r
            w00 + w10, w01 + w02 + w11 + w12, w20, w21 + w22,          # oe: l, x, dl, d
            w00 + w01 + w10 + w11, w02 + w12, w20 + w21, w22,          # oo: x, r, d, dr
            b,
        ]
        return jnp.stack(cols, axis=1)                                  # (C, 17)

    def __call__(self, x):
        n, c, h, w = x.shape
        sf_h, sf_w = self._sf
        ho = int(math.floor(h * sf_h))
        wo = int(math.floor(w * sf_w))
        planes = n * c
        x3 = x.reshape(planes, h, w)                                    # free reshape
        vmem_limit, budget = _vmem_budget()
        itemsize = x.dtype.itemsize

        if self._learned:
            wt = self._merged_weights()                                 # (C, 17)
            wt = jnp.tile(wt, (n, 1)).reshape(planes, 1, 17)            # plane -> channel
            e_np, o_np = _np_scatter_matrices(w)
            e_m = jnp.asarray(e_np)
            o_m = jnp.asarray(o_np)
            per_plane = _per_plane_bytes('learned', h, w, ho, wo, itemsize, 1)
            c_blk = _choose_block(planes, per_plane, budget)
            kernel = partial(_learned_kernel, zeropad=self._zeropad, h=h, w=w)
            out3 = _run_pallas(kernel, x3,
                               [(wt, True), (e_m, False), (o_m, False)],
                               (h, 4 * w), c_blk, vmem_limit)
            return out3.reshape(n, c, ho, wo)                           # free reshape

        # plain nearest / bilinear paths
        a_w = _np_interp_matrix(w, wo, self._interp_mode)               # (Wo, W)
        awt_dtype = x.dtype if self._interp_mode == 'nearest' else jnp.float32
        a_wt = jnp.asarray(a_w.T, dtype=awt_dtype)                      # (W, Wo)

        sh = int(round(sf_h))
        h_is_int = (self._interp_mode == 'nearest' and sh >= 1
                    and abs(sf_h - sh) < 1e-9 and ho == h * sh)
        if h_is_int:
            # H-axis replication via lane concat (no H matmul at all).
            per_plane = _per_plane_bytes('rep', h, w, ho, wo, itemsize, sh)
            c_blk = _choose_block(planes, per_plane, budget)
            kernel = partial(_nearest_rep_kernel, sh=sh)
            out3 = _run_pallas(kernel, x3, [(a_wt, False)],
                               (h, sh * wo), c_blk, vmem_limit)
        else:
            g = 1
            if wo < 128:
                for cand in (4, 2):
                    if ho % cand == 0 and cand * wo <= 512:
                        g = cand
                        break
            ah_split = jnp.asarray(_np_ah_split(h, ho, self._interp_mode, g))
            per_plane = _per_plane_bytes('full', h, w, ho, wo, itemsize, g)
            c_blk = _choose_block(planes, per_plane, budget)
            kernel = partial(_generic_kernel, g=g, h=h, ho=ho)
            out3 = _run_pallas(kernel, x3, [(a_wt, False), (ah_split, False)],
                               (ho // g, g * wo), c_blk, vmem_limit)
        return out3.reshape(n, c, ho, wo)                               # free reshape


# ---------------------------------------------------------------------------
# Pure-JAX / numpy references (sanity checks only)
# ---------------------------------------------------------------------------
def _ref_learned(x, w_chw, bias, zeropad):
    y = jnp.repeat(jnp.repeat(x, 2, axis=2), 2, axis=3)
    if zeropad:
        yp = jnp.pad(y, ((0, 0), (0, 0), (1, 1), (1, 1)))
    else:
        yp = jnp.pad(y, ((0, 0), (0, 0), (1, 1), (1, 1)), mode='edge')
    wk = w_chw.reshape(x.shape[1], 1, 3, 3)
    out = lax.conv_general_dilated(
        yp, wk, (1, 1), 'VALID',
        dimension_numbers=('NCHW', 'OIHW', 'NCHW'),
        feature_group_count=x.shape[1])
    return out + bias[None, :, None, None]


if __name__ == "__main__":
    key = jax.random.PRNGKey(0)
    x = jax.random.normal(key, (2, 4, 16, 16), dtype=jnp.float32)
    x_np = np.asarray(x)

    # nearest (scale 2): must equal numpy repeat
    up_nn = Upsampling('nearest', n_channels=4)
    y_nn = np.asarray(jax.block_until_ready(up_nn(x)))
    ref_nn = np.repeat(np.repeat(x_np, 2, axis=2), 2, axis=3)
    assert y_nn.shape == (2, 4, 32, 32)
    assert np.allclose(y_nn, ref_nn), "nearest mismatch"

    # bilinear (align_corners=False)
    up_bl = Upsampling('bilinear', n_channels=4)
    y_bl = np.asarray(jax.block_until_ready(up_bl(x)))
    a_bl = _bilinear_matrix(16, 32)
    ref_bl = np.einsum('oh,nchw,pw->ncop', a_bl, x_np, a_bl)
    assert y_bl.shape == (2, 4, 32, 32)
    assert np.allclose(y_bl, ref_bl, atol=1e-4), "bilinear mismatch"

    # learned-3x3 (replication pad) and learned-3x3-zeropad (polyphase fused path)
    for mode in ('learned-3x3', 'learned-3x3-zeropad'):
        up = Upsampling(mode, n_channels=4)
        y = np.asarray(jax.block_until_ready(up(x)))
        ref = np.asarray(_ref_learned(x, up.conv_weight, up.conv_bias,
                                      zeropad=(mode == 'learned-3x3-zeropad')))
        assert y.shape == (2, 4, 32, 32)
        assert np.allclose(y, ref, atol=1e-4), mode

    # learned path, multiple grid blocks, non-trivial per-channel weights/bias
    x2 = jax.random.normal(jax.random.PRNGKey(1), (2, 16, 16, 16), dtype=jnp.float32)
    up2 = Upsampling('learned-3x3', n_channels=16)
    up2.conv_weight = jax.random.normal(jax.random.PRNGKey(2), (16, 3, 3),
                                        dtype=jnp.float32) * 0.1
    up2.conv_bias = jnp.arange(16, dtype=jnp.float32) * 0.01
    y2 = np.asarray(jax.block_until_ready(up2(x2)))
    ref2 = np.asarray(_ref_learned(x2, up2.conv_weight, up2.conv_bias, zeropad=False))
    assert y2.shape == (2, 16, 32, 32)
    assert np.allclose(y2, ref2, atol=1e-4), "learned multi-block mismatch"

    # nearest, integer H scale / fractional W scale (rep path + W matrix)
    up_s = Upsampling('nearest', n_channels=4, scale_factor=(3.0, 1.5))
    y_s = np.asarray(jax.block_until_ready(up_s(x)))
    ref_s = np.einsum('oh,nchw,pw->ncop', _nearest_matrix(16, 48), x_np,
                      _nearest_matrix(16, 24))
    assert y_s.shape == (2, 4, 48, 24)
    assert np.allclose(y_s, ref_s), "nearest non-2x scale mismatch"

    # nearest, fractional H scale (generic batched-matmul path)
    up_f = Upsampling('nearest', n_channels=4, scale_factor=(1.5, 2.0))
    y_f = np.asarray(jax.block_until_ready(up_f(x)))
    ref_f = np.einsum('oh,nchw,pw->ncop', _nearest_matrix(16, 24), x_np,
                      _nearest_matrix(16, 32))
    assert y_f.shape == (2, 4, 24, 32)
    assert np.allclose(y_f, ref_f), "nearest fractional-H mismatch"

    print("KERNEL_OK")
</pallas_src>

<mosaic_0001>
module attributes {stable_mosaic.version = 11 : i64} {
  func.func @_nearest_rep_kernel(%arg0: i32, %arg1: memref<2x16x16xf32, #tpu.memory_space<vmem>>, %arg2: memref<16x32xf32, #tpu.memory_space<vmem>>, %arg3: memref<2x16x64xf32, #tpu.memory_space<vmem>>) attributes {dimension_semantics = [#tpu.dimension_semantics<parallel>], iteration_bounds = array<i64: 4>, scalar_prefetch = 0 : i64, scratch_operands = 0 : i64, tpu.core_type = #tpu.core_type<tc>, window_params = [{transform_indices = @transform_0, window_bounds = array<i64: 2, 16, 16>}, {pipeline_mode = #tpu.pipeline_mode<synchronous>, transform_indices = @transform_1, window_bounds = array<i64: 16, 32>}, {transform_indices = @transform_2, window_bounds = array<i64: 2, 16, 64>}]} {
    %c0 = arith.constant 0 : index
    %c0_0 = arith.constant 0 : index
    %c0_1 = arith.constant 0 : index
    %0 = vector.load %arg1[%c0, %c0_0, %c0_1] : memref<2x16x16xf32, #tpu.memory_space<vmem>>, vector<2x16x16xf32>
    %c0_2 = arith.constant 0 : index
    %c0_3 = arith.constant 0 : index
    %1 = vector.load %arg2[%c0_2, %c0_3] : memref<16x32xf32, #tpu.memory_space<vmem>>, vector<16x32xf32>
    %cst = arith.constant dense<0.000000e+00> : vector<2x16x32xf32>
    %2 = tpu.matmul %0, %1, %cst {dimension_numbers = #tpu.dot_dimension_numbers<[2], [0], [0, 1], [1], [0, 0, 0, 1, 1, 1], [], []>} : vector<2x16x16xf32>, vector<16x32xf32>, vector<2x16x32xf32> -> vector<2x16x32xf32>
    %3 = tpu.concatenate %2, %2 in 2 : vector<2x16x32xf32>, vector<2x16x32xf32> -> vector<2x16x64xf32>
    %c0_4 = arith.constant 0 : index
    %c0_5 = arith.constant 0 : index
    %c0_6 = arith.constant 0 : index
    %4 = vector.load %arg3[%c0_4, %c0_5, %c0_6] : memref<2x16x64xf32, #tpu.memory_space<vmem>>, vector<2x16x64xf32>
    tpu.vector_store %arg3[%c0_4, %c0_5, %c0_6], %3 {strides = array<i32>} : memref<2x16x64xf32, #tpu.memory_space<vmem>>, vector<2x16x64xf32>,
    return
  }
  func.func @transform_0(%arg0: i32) -> (i32, i32, i32) {
    %c0_i32 = arith.constant 0 : i32
    %c0_i32_0 = arith.constant 0 : i32
    %c0_i32_1 = arith.constant 0 : i32
    return %arg0, %c0_i32, %c0_i32_0 : i32, i32, i32
  }
  func.func @transform_1(%arg0: i32) -> (i32, i32) {
    %c0_i32 = arith.constant 0 : i32
    %c0_i32_0 = arith.constant 0 : i32
    %c0_i32_1 = arith.constant 0 : i32
    return %c0_i32, %c0_i32_0 : i32, i32
  }
  func.func @transform_2(%arg0: i32) -> (i32, i32, i32) {
    %c0_i32 = arith.constant 0 : i32
    %c0_i32_0 = arith.constant 0 : i32
    %c0_i32_1 = arith.constant 0 : i32
    return %arg0, %c0_i32, %c0_i32_0 : i32, i32, i32
  }
}

</mosaic_0001>

<llo_original>
// kernel: tpu_custom_call.1
$region0: #{tpu_custom_call.1}
  #allocation0 [shape = 'u32[]', space=smem, size = 0x4, offset = 0x4, fixed_abs, tag = 'smem constant byte address 0x4 - core index']
  #allocation1 [shape = 'u32[72,128]{1,0:T(1,128)}', space=vmem, size = 0x9000, scoped, tag = 'internal scratch']
  %s0 = inlined_call_operand.hbm [shape: f32[8,16,16], index: 0, kind: input, shape index: {}]
  %s1 = inlined_call_operand.hbm [shape: f32[16,32], index: 1, kind: input, shape index: {}]
  %s2 = inlined_call_operand.hbm [shape: f32[8,16,64], index: 2, kind: output, shape index: {}]
  %s3 = sld [smem:[#allocation0]]
  $region49: #{tpu_custom_call.1} parent=0
    _
  %s5 = ssub.s32 1, %s3
  %s6 = scalar_select 0, %s5, %s3
  $region1: #{tpu_custom_call.1} parent=0
    #allocation2 [shape = 'u8[32768]{0}', space=vmem, size = 0x8000, scoped, tag = 'input window, operand 0']
    #allocation3 [shape = 's32[2]{0}', space=sflag, size = 0x8, scoped, tag = 'scoped memory for tpu_custom_call.1']
    #allocation4 [shape = 's32[2]{0}', space=sflag, size = 0x8, scoped, tag = 'scoped memory for tpu_custom_call.1']
    #allocation5 [shape = 'u8[8192]{0}', space=vmem, size = 0x2000, scoped, tag = 'input window, operand 1, single buffered']
    #allocation6 [shape = 's32[1]{0}', space=sflag, size = 0x4, scoped, tag = 'scoped memory for tpu_custom_call.1']
    #allocation7 [shape = 'u8[32768]{0}', space=vmem, size = 0x8000, scoped, tag = 'output window, operand 0']
    %7 = vsyncpa [#allocation3], 0
    %s8 = scalar_lea.sflag [#allocation3], 1
    %9 = vsyncpa %s8, 0
    %10 = vsyncpa [#allocation6], 0
    %11 = vsyncpa [#allocation4], 0
    %s12 = scalar_lea.sflag [#allocation4], 1
    %13 = vsyncpa %s12, 0
    loop: start=0, step=1, limit=6
    $region2: #{tpu_custom_call.1} parent=1 // loop_pre_header
      _
    $region3: #{tpu_custom_call.1} parent=1 // loop_header
      %s15 = sphi 0, %s19
      %p16 = scmp.ge.s32.totalorder %s15, 6
      %s25 = sphi 0, %s27
      %s28 = sphi 0, %s25
      %s29 = sphi 0, %s28
      %s45 = sphi 0, %s29
      %s49 = sphi 0, %s49
      %s51 = sphi 0, %s49
      %s52 = sphi 0, %s51
      %s66 = sphi 0, %s52
      %s72 = sphi 0, %s74
      %s75 = sphi 0, %s72
      %s76 = sphi 0, %s75
      %s92 = sphi 0, %s76
    $region4: #{tpu_custom_call.1} parent=1 // loop_header_branch
      %18 = sbr.rel (%p16) target = $region8
    $region5: #{tpu_custom_call.1} parent=1 // loop_body
      %s20 = ssub.s32 %s15, 1
      %s21 = ssub.s32 %s15, 2
      %s22 = sadd.s32 %s15, 1
      %s23 = ssub.s32 %s15, %s22
      %p24 = scmp.eq.s32.totalorder %s23, 0
      %s26 = sadd.s32 %s25, 1
      %s27 = scalar_select %p24, %s25, %s26
      %p30 = pneg %p24
      %p31 = scmp.eq.s32.totalorder %s15, 3
      %p32 = por %p30, %p31
      %p33 = scmp.ne.s32.totalorder %s25, %s28
      %p34 = scmp.eq.s32.totalorder %s15, 0
      %p35 = por %p33, %p34
      %p36 = scmp.ne.s32.totalorder %s25, %s28
      %p37 = scmp.eq.s32.totalorder %s20, 3
      %p38 = por %p36, %p37
      %p39 = scmp.ne.s32.totalorder %s28, %s29
      %p40 = scmp.eq.s32.totalorder %s20, 0
      %p41 = por %p39, %p40
      %p42 = scmp.ne.s32.totalorder %s28, %s29
      %p43 = scmp.eq.s32.totalorder %s21, 3
      %p44 = por %p42, %p43
      %p46 = scmp.ne.s32.totalorder %s29, %s45
      %p47 = scmp.eq.s32.totalorder %s21, 0
      %p48 = por %p46, %p47
      %s50 = sadd.s32 %s49, 1
      %p53 = scmp.eq.s32.totalorder %s15, 3
      %p54 = scmp.ne.s32.totalorder %s49, %s51
      %p55 = scmp.eq.s32.totalorder %s15, 0
      %p56 = por %p54, %p55
      %p57 = scmp.ne.s32.totalorder %s49, %s51
      %p58 = scmp.eq.s32.totalorder %s20, 3
      %p59 = por %p57, %p58
      %p60 = scmp.ne.s32.totalorder %s51, %s52
      %p61 = scmp.eq.s32.totalorder %s20, 0
      %p62 = por %p60, %p61
      %p63 = scmp.ne.s32.totalorder %s51, %s52
      %p64 = scmp.eq.s32.totalorder %s21, 3
      %p65 = por %p63, %p64
      %p67 = scmp.ne.s32.totalorder %s52, %s66
      %p68 = scmp.eq.s32.totalorder %s21, 0
      %p69 = por %p67, %p68
      %s70 = ssub.s32 %s15, %s22
      %p71 = scmp.eq.s32.totalorder %s70, 0
      %s73 = sadd.s32 %s72, 1
      %s74 = scalar_select %p71, %s72, %s73
      %p77 = pneg %p71
      %p78 = scmp.eq.s32.totalorder %s15, 3
      %p79 = por %p77, %p78
      %p80 = scmp.ne.s32.totalorder %s72, %s75
      %p81 = scmp.eq.s32.totalorder %s15, 0
      %p82 = por %p80, %p81
      %p83 = scmp.ne.s32.totalorder %s72, %s75
      %p84 = scmp.eq.s32.totalorder %s20, 3
      %p85 = por %p83, %p84
      %p86 = scmp.ne.s32.totalorder %s75, %s76
      %p87 = scmp.eq.s32.totalorder %s20, 0
      %p88 = por %p86, %p87
      %p89 = scmp.ne.s32.totalorder %s75, %s76
      %p90 = scmp.eq.s32.totalorder %s21, 3
      %p91 = por %p89, %p90
      %p93 = scmp.ne.s32.totalorder %s76, %s92
      %p94 = scmp.eq.s32.totalorder %s21, 0
      %p95 = por %p93, %p94
      %p96 = scmp.le.s32.totalorder 1, %s15
      %p97 = scmp.lt.s32.totalorder %s15, 5
      %p98 = pnand %p96, %p97
      %p99 = pneg %p98
      // Predicated region
      $region9: #{tpu_custom_call.1} parent=5 // pred_check
        _
      $region10: #{tpu_custom_call.1} parent=5 // pred_check_branch
        %101 = sbr.rel (%p98) target = $region12
      $region11: #{tpu_custom_call.1} parent=5 // pred_region
        %s102 = ssub.s32 %s15, 1
        // Predicated region
        $region13: #{tpu_custom_call.1} parent=11 // pred_check
          %p103 = pneg %p62
        $region14: #{tpu_custom_call.1} parent=11 // pred_check_branch
          %105 = sbr.rel (%p103) target = $region16
        $region15: #{tpu_custom_call.1} parent=11 // pred_region
          %107 = vsyncadd [#allocation6], 0
          %s108 = sshll.u32 %s1, 4
          %s109 = int_to_ptr.hbm [resolvable:$true] %s108
          %s110 = sshll.u32 [#allocation5], 4
          %s111 = int_to_ptr.vmem [resolvable:$true] %s110
          %116 = dma.hbm_to_vmem [thread:$0]  %s109, 256, %s111, [#allocation6], 128, 128, 8
        $region16: #{tpu_custom_call.1} parent=11 // pred_fallthru
          _
      $region12: #{tpu_custom_call.1} parent=5 // pred_fallthru
        _
      %p117 = scmp.lt.s32.totalorder %s15, 4
      // Predicated region
      $region17: #{tpu_custom_call.1} parent=5 // pred_check
        %p118 = pneg %p117
      $region18: #{tpu_custom_call.1} parent=5 // pred_check_branch
        %120 = sbr.rel (%p118) target = $region20
      $region19: #{tpu_custom_call.1} parent=5 // pred_region
        // Predicated region
        $region21: #{tpu_custom_call.1} parent=19 // pred_check
          %p121 = pneg %p35
        $region22: #{tpu_custom_call.1} parent=19 // pred_check_branch
          %123 = sbr.rel (%p121) target = $region24
        $region23: #{tpu_custom_call.1} parent=19 // pred_region
          %s124 = sand.u32 %s25, 1
          %s125 = scalar_lea.sflag [#allocation3], %s124
          %s126 = sand.u32 %s25, 1
          %s127 = smul.addr %s126, 32
          %s128 = scalar_lea.vmem [#allocation2], %s127
          %s129 = smul.u32 2, %s15
          %131 = vsyncadd %s125, 0
          %s132 = smul.addr %s129, 2
          %s133 = smul.addr %s132, 8
          %s134 = scalar_lea.hbm %s0, %s133
          %s135 = sshll.u32 %s134, 4
          %s136 = int_to_ptr.hbm [resolvable:$true] %s135
          %s137 = sshll.u32 %s128, 4
          %s138 = int_to_ptr.vmem [resolvable:$true] %s137
          %143 = dma.hbm_to_vmem [thread:$0]  %s136, 512, %s138, %s125, 128, 128, 8
        $region24: #{tpu_custom_call.1} parent=19 // pred_fallthru
          _
      $region20: #{tpu_custom_call.1} parent=5 // pred_fallthru
        _
      %p144 = scmp.le.s32.totalorder 1, %s15
      %p145 = scmp.lt.s32.totalorder %s15, 5
      %p146 = pnand %p144, %p145
      %p147 = pneg %p146
      // Predicated region
      $region25: #{tpu_custom_call.1} parent=5 // pred_check
        _
      $region26: #{tpu_custom_call.1} parent=5 // pred_check_branch
        %149 = sbr.rel (%p146) target = $region28
      $region27: #{tpu_custom_call.1} parent=5 // pred_region
        %s150 = ssub.s32 %s15, 1
        %s151 = sand.u32 %s28, 1
        %s152 = scalar_lea.sflag [#allocation3], %s151
        %s153 = sand.u32 %s28, 1
        %s154 = smul.addr %s153, 32
        %s155 = scalar_lea.vmem [#allocation2], %s154
        // Predicated region
        $region29: #{tpu_custom_call.1} parent=27 // pred_check
          %p156 = pneg %p41
        $region30: #{tpu_custom_call.1} parent=27 // pred_check_branch
          %158 = sbr.rel (%p156) target = $region32
        $region31: #{tpu_custom_call.1} parent=27 // pred_region
          %160 = dma.done %s152, 512
        $region32: #{tpu_custom_call.1} parent=27 // pred_fallthru
          _
        // Predicated region
        $region33: #{tpu_custom_call.1} parent=27 // pred_check
          %p161 = pneg %p62
        $region34: #{tpu_custom_call.1} parent=27 // pred_check_branch
          %163 = sbr.rel (%p161) target = $region36
        $region35: #{tpu_custom_call.1} parent=27 // pred_region
          %165 = dma.done [#allocation6], 256
        $region36: #{tpu_custom_call.1} parent=27 // pred_fallthru
          _
        %s166 = sand.u32 %s28, 1
        %s167 = scalar_lea.sflag [#allocation3], %s166
        %s168 = sand.u32 %s28, 1
        %s169 = smul.addr %s168, 32
        %s170 = scalar_lea.vmem [#allocation2], %s169
        %p171 = pneg %p41
        %p172 = pneg %p38
        %p173 = pneg %p62
        %p174 = pneg %p59
        %p175 = pneg %p88
        %p176 = pneg %p85
        %s177 = sand.u32 %s75, 1
        %s178 = scalar_lea.sflag [#allocation4], %s177
        %s179 = sand.u32 %s75, 1
        %s180 = smul.addr %s179, 32
        %s181 = scalar_lea.vmem [#allocation7], %s180
        %s182 = smul.u32 2, %s20
        %s183 = smul.u32 2, %s20
        %v184 = vld [vmem:[%s155] sm:$0xff]
        %v185 = vld [vmem:[%s155 + $0x8] sm:$0xff]
        %v186 = vld [vmem:[%s155 + $0x10] sm:$0xff]
        %v187 = vld [vmem:[%s155 + $0x18] sm:$0xff]
        %v188 = vld [vmem:[#allocation5] sm:$0xff]
        %v189 = vld [vmem:[#allocation5 + $0x8] sm:$0xff]
        %vm190 = vcmask 130048
        %v192 = vsel %vm190, %v184, 0
        %v195 = vsel %vm190, %v185, 0
        %v198 = vsel %vm190, %v186, 0
        %v201 = vsel %vm190, %v187, 0
        %203 = vmatpush.msra.mxu0 0.0
        %204 = vmatpush.msra.mxu0 0.0
        %205 = vmatpush.msra.mxu0 0.0
        %206 = vmatpush.msra.mxu0 0.0
        %207 = vmatpush.msra.mxu0 0.0
        %208 = vmatpush.msra.mxu0 0.0
        %209 = vmatpush.msra.mxu0 0.0
        %210 = vmatpush.msra.mxu0 0.0
        %211 = vmatpush.msra.mxu0 0.0
        %212 = vmatpush.msra.mxu0 0.0
        %213 = vmatpush.msra.mxu0 0.0
        %214 = vmatpush.msra.mxu0 0.0
        %215 = vmatpush.msra.mxu0 0.0
        %216 = vmatpush.msra.mxu0 0.0
        %217 = vmatpush.msra.mxu0 %v189
        %218 = vmatpush.msra.mxu0 %v188
        %219 = vmatmul.f32.gmra.mxu0 %v192
        %v220 = vpop.f32.mrf.mxu0
        %v221 = vadd.f32 0.0, %v220
        %222 = vmatmul.f32.gmra.mxu0 %v195
        %v223 = vpop.f32.mrf.mxu0
        %v224 = vadd.f32 0.0, %v223
        %225 = vmatmul.f32.gmra.mxu0 %v198
        %v226 = vpop.f32.mrf.mxu0
        %v227 = vadd.f32 0.0, %v226
        %228 = vmatmul.f32.gmra.mxu0 %v201
        %v229 = vpop.f32.mrf.mxu0
        %v230 = vadd.f32 0.0, %v229
        %231 = vdwg.mxu0
        %236 = vrot.lane.b32.xlu0 %v221, 32
        %v237 = vpop.permute.xlu0 %236
        %238 = vrot.lane.b32.xlu0 %v224, 32
        %v239 = vpop.permute.xlu0 %238
        %240 = vrot.lane.b32.xlu0 %v227, 32
        %v241 = vpop.permute.xlu0 %240
        %242 = vrot.lane.b32.xlu0 %v230, 32
        %v243 = vpop.permute.xlu0 %242
        %vm248 = vcmask 261120
        %v249 = vsel %vm248, %v221, %v237
        %v250 = vsel %vm248, %v224, %v239
        %v251 = vsel %vm248, %v227, %v241
        %v252 = vsel %vm248, %v230, %v243
        %vm253 = vcmask 523264
        %254 = vst.msk [vmem:[%s181] sm:$0xff] %vm253, %v249
        %255 = vst.msk [vmem:[%s181 + $0x8] sm:$0xff] %vm253, %v250
        %256 = vst.msk [vmem:[%s181 + $0x10] sm:$0xff] %vm253, %v251
        %257 = vst.msk [vmem:[%s181 + $0x18] sm:$0xff] %vm253, %v252
        %s258 = sand.u32 %s75, 1
        %s259 = scalar_lea.sflag [#allocation4], %s258
        %s260 = sand.u32 %s75, 1
        %s261 = smul.addr %s260, 32
        %s262 = scalar_lea.vmem [#allocation7], %s261
        // Predicated region
        $region37: #{tpu_custom_call.1} parent=27 // pred_check
          %p263 = pneg %p85
        $region38: #{tpu_custom_call.1} parent=27 // pred_check_branch
          %265 = sbr.rel (%p263) target = $region40
        $region39: #{tpu_custom_call.1} parent=27 // pred_region
          %s266 = smul.u32 2, %s20
          %268 = vsyncadd %s259, 0
          %s269 = smul.addr %s266, 2
          %s270 = smul.addr %s269, 8
          %s271 = scalar_lea.hbm %s2, %s270
          %s272 = sshll.u32 %s262, 4
          %s273 = int_to_ptr.vmem [resolvable:$true] %s272
          %s274 = sshll.u32 %s271, 4
          %s275 = int_to_ptr.hbm [resolvable:$true] %s274
          %280 = dma.vmem_to_hbm [thread:$0]  %s273, 512, %s275, %s259, 128, 128, 8
        $region40: #{tpu_custom_call.1} parent=27 // pred_fallthru
          _
      $region28: #{tpu_custom_call.1} parent=5 // pred_fallthru
        _
      %p281 = scmp.le.s32.totalorder 2, %s15
      // Predicated region
      $region41: #{tpu_custom_call.1} parent=5 // pred_check
        %p282 = pneg %p281
      $region42: #{tpu_custom_call.1} parent=5 // pred_check_branch
        %284 = sbr.rel (%p282) target = $region44
      $region43: #{tpu_custom_call.1} parent=5 // pred_region
        %s285 = ssub.s32 %s15, 2
        // Predicated region
        $region45: #{tpu_custom_call.1} parent=43 // pred_check
          %p286 = pneg %p91
        $region46: #{tpu_custom_call.1} parent=43 // pred_check_branch
          %288 = sbr.rel (%p286) target = $region48
        $region47: #{tpu_custom_call.1} parent=43 // pred_region
          %s289 = sand.u32 %s76, 1
          %s290 = scalar_lea.sflag [#allocation4], %s289
          %s291 = sand.u32 %s76, 1
          %s292 = smul.addr %s291, 32
          %s293 = scalar_lea.vmem [#allocation7], %s292
          %295 = dma.done %s290, 512
        $region48: #{tpu_custom_call.1} parent=43 // pred_fallthru
          _
      $region44: #{tpu_custom_call.1} parent=5 // pred_fallthru
        _
    $region6: #{tpu_custom_call.1} parent=1 // loop_footer
      %s19 = sadd.s32 1, %s15
    $region7: #{tpu_custom_call.1} parent=1 // loop_footer_branch
      %14 = sbr.rel target = $region3
    $region8: #{tpu_custom_call.1} parent=1 // loop_exit
      _
    %296 = vsyncpa [#allocation3], 1
    %s297 = scalar_lea.sflag [#allocation3], 1
    %298 = vsyncpa %s297, 1
    %299 = vsyncpa [#allocation6], 1
    %300 = vsyncpa [#allocation4], 1
    %s301 = scalar_lea.sflag [#allocation4], 1
    %302 = vsyncpa %s301, 1

</llo_original>
